<compile_context>
chip_gen: v7x
topology: tpu7x:2x2x1
jax: 0.10.0
libtpu: 0.0.40
codegen_flags: <defaults>
</compile_context>

<pallas_src>
import math

import jax
import jax.numpy as jnp
import numpy as np
from jax import lax
from jax.experimental import pallas as pl
from jax.experimental.pallas import tpu as pltpu


def _sigmoid(x):
    # sigmoid(x) == 0.5 * (tanh(x/2) + 1): one EUP transcendental instead of
    # exp + divide (the EUP has a single VLIW slot on v5e/v6e/v7x).
    return 0.5 * jnp.tanh(0.5 * x) + 0.5


def _bilstm_kernel(len_ref, x_ref,
                   wih_f_ref, whh_f_ref, b_f_ref,
                   wih_b_ref, whh_b_ref, b_b_ref,
                   whp_f_ref, whp_b_ref, wcp_f_ref, wcp_b_ref,
                   out_ref, hdec_ref, cdec_ref,
                   xpf_ref, xpb_ref, hsf_ref, hsb_ref):
    """Fused bidirectional LSTM over full-VMEM blocks.

    Shapes (B = batch padded to a multiple of 8, H = hidden size):
      len_ref : (B, 1) int32          valid length per sequence
      x_ref   : (T*B, E)              embedded source, matmul dtype
      wih_*   : (E, 4H), whh_* : (H, 4H), b_* : (1, 4H) f32
      whp_*/wcp_* : (H, H)            pre-split decoder-init projections
      out_ref : (T, B, 2H) f32        [fwd | bwd] hidden stream
      hdec/cdec : (B, H) f32
      xp*_ref : (T, B, 4H) f32 scratch (hoisted input projections)
      hs*_ref : (T, B, H)  f32 scratch (per-direction hidden streams)
    """
    T, B, H = hsf_ref.shape
    cdt = wih_f_ref.dtype               # matmul compute dtype (bf16 by default)

    # ---- hoisted input projections: ONE dense MXU matmul per direction -----
    # (bias folded in here, so the recurrence below only does x_proj + h@Whh)
    x = x_ref[...]
    xpf_ref[...] = (jnp.dot(x, wih_f_ref[...],
                            preferred_element_type=jnp.float32)
                    + b_f_ref[...]).reshape(T, B, 4 * H)
    xpb_ref[...] = (jnp.dot(x, wih_b_ref[...],
                            preferred_element_type=jnp.float32)
                    + b_b_ref[...]).reshape(T, B, 4 * H)

    whh_f = whh_f_ref[...]
    whh_b = whh_b_ref[...]
    len_v = len_ref[...]                # (B, 1) int32

    def lstm_update(gates, h, c, m):
        # PyTorch gate order: i, f, g, o.
        i = _sigmoid(gates[:, 0 * H:1 * H])
        f = _sigmoid(gates[:, 1 * H:2 * H])
        g = jnp.tanh(gates[:, 2 * H:3 * H])
        o = _sigmoid(gates[:, 3 * H:4 * H])
        c_new = f * c + i * g
        h_new = o * jnp.tanh(c_new)
        h_out = jnp.where(m, h_new, 0.0)      # pad_packed: zeros past length
        h_nxt = jnp.where(m, h_new, h)        # freeze state past length
        c_nxt = jnp.where(m, c_new, c)
        return h_nxt, c_nxt, h_out

    zeros = jnp.zeros((B, H), jnp.float32)

    # ---- fused fwd/bwd recurrence: fwd at t, bwd at T-1-t per iteration ----
    def body(it, carry):
        h_f, c_f, h_b, c_b = carry
        tf = it
        tb = T - 1 - it
        gates_f = xpf_ref[tf] + jnp.dot(h_f.astype(cdt), whh_f,
                                        preferred_element_type=jnp.float32)
        gates_b = xpb_ref[tb] + jnp.dot(h_b.astype(cdt), whh_b,
                                        preferred_element_type=jnp.float32)
        h_f, c_f, ho_f = lstm_update(gates_f, h_f, c_f, len_v > tf)
        h_b, c_b, ho_b = lstm_update(gates_b, h_b, c_b, len_v > tb)
        hsf_ref[tf] = ho_f
        hsb_ref[tb] = ho_b
        return h_f, c_f, h_b, c_b

    h_f, c_f, h_b, c_b = lax.fori_loop(0, T, body, (zeros, zeros, zeros, zeros))

    # Single combined, lane-dense (2H-wide) write of the hidden stream.
    out_ref[...] = jnp.concatenate([hsf_ref[...], hsb_ref[...]], axis=2)

    # Decoder-init projections, concat-free:
    #   cat(h_f, h_b) @ W.T == h_f @ W[:, :H].T + h_b @ W[:, H:].T
    hdec_ref[...] = (
        jnp.dot(h_f.astype(cdt), whp_f_ref[...],
                preferred_element_type=jnp.float32)
        + jnp.dot(h_b.astype(cdt), whp_b_ref[...],
                  preferred_element_type=jnp.float32))
    cdec_ref[...] = (
        jnp.dot(c_f.astype(cdt), wcp_f_ref[...],
                preferred_element_type=jnp.float32)
        + jnp.dot(c_b.astype(cdt), wcp_b_ref[...],
                  preferred_element_type=jnp.float32))


def _round_up(x, m):
    return ((x + m - 1) // m) * m


def init_encoder_params(key, vocab_size, embed_size, hidden_size):
    """Deterministic synthetic parameters, PyTorch-shaped."""
    ks = jax.random.split(key, 11)
    H, E, V = hidden_size, embed_size, vocab_size
    s = 0.1
    return {
        "embedding": jax.random.normal(ks[0], (V, E), jnp.float32) * s,
        # forward direction
        "W_ih_f": jax.random.normal(ks[1], (4 * H, E), jnp.float32) * s,
        "W_hh_f": jax.random.normal(ks[2], (4 * H, H), jnp.float32) * s,
        "b_ih_f": jax.random.normal(ks[3], (4 * H,), jnp.float32) * s,
        "b_hh_f": jax.random.normal(ks[4], (4 * H,), jnp.float32) * s,
        # backward direction
        "W_ih_b": jax.random.normal(ks[5], (4 * H, E), jnp.float32) * s,
        "W_hh_b": jax.random.normal(ks[6], (4 * H, H), jnp.float32) * s,
        "b_ih_b": jax.random.normal(ks[7], (4 * H,), jnp.float32) * s,
        "b_hh_b": jax.random.normal(ks[8], (4 * H,), jnp.float32) * s,
        # projections (Linear(2H -> H, bias=False): weight shape (H, 2H))
        "W_hproj": jax.random.normal(ks[9], (H, 2 * H), jnp.float32) * s,
        "W_cproj": jax.random.normal(ks[10], (H, 2 * H), jnp.float32) * s,
    }


def encoder_forward(source_padded, source_lengths, params,
                    matmul_dtype=jnp.bfloat16):
    """
    source_padded : (T, B) int32 token ids (seq-first, like PyTorch)
    source_lengths: (B,) valid lengths
    returns (enc_hiddens (B, T, 2H), (init_dec_hidden (B, H), init_dec_cell (B, H)))
    """
    # Embedding lookup (gather) stays in XLA as glue.
    X = params["embedding"][source_padded].astype(jnp.float32)   # (T, B, E)
    T, B, E = X.shape
    H = params["W_hh_f"].shape[1]

    # Pad batch to a multiple of 8 (f32 sublane tile) so every per-timestep
    # (B, .) row group is tile-aligned.  Padded rows get length 0 and are
    # fully masked inside the kernel (their states / outputs stay 0).
    Bp = _round_up(max(B, 8), 8)
    lengths = jnp.asarray(source_lengths, jnp.int32)
    if Bp != B:
        X = jnp.pad(X, ((0, 0), (0, Bp - B), (0, 0)))
        lengths = jnp.pad(lengths, (0, Bp - B))
    x2d = X.reshape(T * Bp, E).astype(matmul_dtype)
    len2d = lengths.reshape(Bp, 1)

    # Weight prep: pre-transpose for lane-friendly x @ W matmuls, fold the two
    # LSTM biases, pre-split the no-bias projections (concat-free in-kernel),
    # and cast matmul operands to bf16 (f32 accumulation inside the kernel).
    cdt = matmul_dtype
    wih_f = params["W_ih_f"].T.astype(cdt)                           # (E, 4H)
    whh_f = params["W_hh_f"].T.astype(cdt)                           # (H, 4H)
    b_f = (params["b_ih_f"] + params["b_hh_f"]).reshape(1, 4 * H).astype(jnp.float32)
    wih_b = params["W_ih_b"].T.astype(cdt)
    whh_b = params["W_hh_b"].T.astype(cdt)
    b_b = (params["b_ih_b"] + params["b_hh_b"]).reshape(1, 4 * H).astype(jnp.float32)
    whp_f = params["W_hproj"][:, :H].T.astype(cdt)                   # (H, H)
    whp_b = params["W_hproj"][:, H:].T.astype(cdt)
    wcp_f = params["W_cproj"][:, :H].T.astype(cdt)
    wcp_b = params["W_cproj"][:, H:].T.astype(cdt)

    inputs = (len2d, x2d, wih_f, whh_f, b_f, wih_b, whh_b, b_b,
              whp_f, whp_b, wcp_f, wcp_b)

    scratch_defs = [
        ((T, Bp, 4 * H), jnp.float32),   # fwd hoisted input projection
        ((T, Bp, 4 * H), jnp.float32),   # bwd hoisted input projection
        ((T, Bp, H), jnp.float32),       # fwd hidden stream
        ((T, Bp, H), jnp.float32),       # bwd hidden stream
    ]
    out_shapes = (
        jax.ShapeDtypeStruct((T, Bp, 2 * H), jnp.float32),   # enc hiddens
        jax.ShapeDtypeStruct((Bp, H), jnp.float32),          # init dec hidden
        jax.ShapeDtypeStruct((Bp, H), jnp.float32),          # init dec cell
    )

    # Size the scoped VMEM limit to actual residency (defaults are 16/32 MiB).
    resident = (
        sum(int(a.size) * a.dtype.itemsize for a in inputs)
        + sum(math.prod(s.shape) * np.dtype(s.dtype).itemsize for s in out_shapes)
        + sum(math.prod(sh) * np.dtype(dt).itemsize for sh, dt in scratch_defs))
    vmem_limit = int(min(128 * 1024 * 1024,
                         max(32 * 1024 * 1024, 2 * resident + (2 << 20))))

    # TODO(synk): for long sequences / large H, stream over T (chunked hoisted
    # projection + pipelined output writeback) instead of full VMEM residency,
    # and on v7x split the two directions across the two TensorCores.
    vmem = pl.BlockSpec(memory_space=pltpu.MemorySpace.VMEM)
    out3d, hdec, cdec = pl.pallas_call(
        _bilstm_kernel,
        in_specs=[vmem] * len(inputs),
        out_specs=(vmem, vmem, vmem),
        out_shape=out_shapes,
        scratch_shapes=[pltpu.VMEM(sh, dt) for sh, dt in scratch_defs],
        compiler_params=pltpu.CompilerParams(vmem_limit_bytes=vmem_limit),
    )(*inputs)

    # TODO(synk): land (B, T, 2H) directly from the kernel via a batch-tiled
    # output index_map instead of this XLA transpose.
    enc_hiddens = jnp.transpose(out3d[:, :B, :], (1, 0, 2))          # (B, T, 2H)
    return enc_hiddens, (hdec[:B], cdec[:B])


def encoder_reference(source_padded, source_lengths, params):
    """Pure-JAX (f32) reference with PyTorch pack/pad semantics."""
    X = params["embedding"][source_padded].astype(jnp.float32)   # (T, B, E)
    T, B, _ = X.shape
    H = params["W_hh_f"].shape[1]
    lengths = jnp.asarray(source_lengths, jnp.int32)
    mask = (jnp.arange(T)[:, None] < lengths[None, :]).astype(jnp.float32)[:, :, None]

    def run(wih, whh, b, xs, ms):
        def step(carry, inp):
            h, c = carry
            x_t, m_t = inp
            gates = x_t @ wih.T + h @ whh.T + b
            i = jax.nn.sigmoid(gates[:, 0 * H:1 * H])
            f = jax.nn.sigmoid(gates[:, 1 * H:2 * H])
            g = jnp.tanh(gates[:, 2 * H:3 * H])
            o = jax.nn.sigmoid(gates[:, 3 * H:4 * H])
            c_new = f * c + i * g
            h_new = o * jnp.tanh(c_new)
            h_out = m_t * h_new
            h = m_t * h_new + (1.0 - m_t) * h
            c = m_t * c_new + (1.0 - m_t) * c
            return (h, c), h_out
        init = (jnp.zeros((B, H), jnp.float32), jnp.zeros((B, H), jnp.float32))
        (h, c), outs = lax.scan(step, init, (xs, ms))
        return outs, h, c

    b_f = params["b_ih_f"] + params["b_hh_f"]
    b_b = params["b_ih_b"] + params["b_hh_b"]
    out_f, h_f, c_f = run(params["W_ih_f"], params["W_hh_f"], b_f, X, mask)
    out_b, h_b, c_b = run(params["W_ih_b"], params["W_hh_b"], b_b,
                          X[::-1], mask[::-1])
    out_b = out_b[::-1]
    enc = jnp.concatenate([out_f, out_b], axis=-1).transpose(1, 0, 2)
    hdec = jnp.concatenate([h_f, h_b], axis=1) @ params["W_hproj"].T
    cdec = jnp.concatenate([c_f, c_b], axis=1) @ params["W_cproj"].T
    return enc, (hdec, cdec)


if __name__ == "__main__":
    key = jax.random.PRNGKey(0)
    kp, kd = jax.random.split(key)

    VOCAB, EMBED, HIDDEN = 20, 32, 32
    T, B = 8, 2
    source_lengths = [8, 5]   # sorted descending, as pack_padded_sequence expects

    params = init_encoder_params(kp, VOCAB, EMBED, HIDDEN)

    source_padded = jax.random.randint(kd, (T, B), 0, VOCAB, dtype=jnp.int32)
    # zero out padded positions (cosmetic; they are masked in the kernel anyway)
    len_arr = jnp.asarray(source_lengths, jnp.int32)
    pad_mask = jnp.arange(T)[:, None] < len_arr[None, :]
    source_padded = jnp.where(pad_mask, source_padded, 0)

    enc_hiddens, (dec_h, dec_c) = encoder_forward(source_padded, source_lengths, params)
    jax.block_until_ready((enc_hiddens, dec_h, dec_c))

    assert enc_hiddens.shape == (B, T, 2 * HIDDEN)
    assert dec_h.shape == (B, HIDDEN) and dec_c.shape == (B, HIDDEN)
    assert bool(jnp.all(jnp.isfinite(enc_hiddens)))
    # pad_packed_sequence semantics: steps past the valid length are exactly 0
    assert bool(jnp.all(enc_hiddens[1, source_lengths[1]:, :] == 0.0))

    # Numerical check against a pure-JAX f32 reference (bf16-matmul tolerance).
    ref_enc, (ref_h, ref_c) = encoder_reference(source_padded, source_lengths, params)
    assert bool(jnp.allclose(enc_hiddens, ref_enc, atol=5e-2, rtol=5e-2))
    assert bool(jnp.allclose(dec_h, ref_h, atol=5e-2, rtol=5e-2))
    assert bool(jnp.allclose(dec_c, ref_c, atol=5e-2, rtol=5e-2))

    print("KERNEL_OK")
</pallas_src>

<mosaic_0001>
module attributes {stable_mosaic.version = 11 : i64} {
  func.func @_bilstm_kernel(%arg0: memref<8x1xi32, #tpu.memory_space<vmem>>, %arg1: memref<64x32xbf16, #tpu.memory_space<vmem>>, %arg2: memref<32x128xbf16, #tpu.memory_space<vmem>>, %arg3: memref<32x128xbf16, #tpu.memory_space<vmem>>, %arg4: memref<1x128xf32, #tpu.memory_space<vmem>>, %arg5: memref<32x128xbf16, #tpu.memory_space<vmem>>, %arg6: memref<32x128xbf16, #tpu.memory_space<vmem>>, %arg7: memref<1x128xf32, #tpu.memory_space<vmem>>, %arg8: memref<32x32xbf16, #tpu.memory_space<vmem>>, %arg9: memref<32x32xbf16, #tpu.memory_space<vmem>>, %arg10: memref<32x32xbf16, #tpu.memory_space<vmem>>, %arg11: memref<32x32xbf16, #tpu.memory_space<vmem>>, %arg12: memref<8x8x64xf32, #tpu.memory_space<vmem>>, %arg13: memref<8x32xf32, #tpu.memory_space<vmem>>, %arg14: memref<8x32xf32, #tpu.memory_space<vmem>>, %arg15: memref<8x8x128xf32, #tpu.memory_space<vmem>>, %arg16: memref<8x8x128xf32, #tpu.memory_space<vmem>>, %arg17: memref<8x8x32xf32, #tpu.memory_space<vmem>>, %arg18: memref<8x8x32xf32, #tpu.memory_space<vmem>>) attributes {dimension_semantics = [], scalar_prefetch = 0 : i64, scratch_operands = 4 : i64, tpu.core_type = #tpu.core_type<tc>} {
    %c0 = arith.constant 0 : index
    %c0_0 = arith.constant 0 : index
    %0 = vector.load %arg1[%c0, %c0_0] : memref<64x32xbf16, #tpu.memory_space<vmem>>, vector<64x32xbf16>
    %c0_1 = arith.constant 0 : index
    %c0_2 = arith.constant 0 : index
    %1 = vector.load %arg2[%c0_1, %c0_2] : memref<32x128xbf16, #tpu.memory_space<vmem>>, vector<32x128xbf16>
    %cst = arith.constant dense<0.000000e+00> : vector<64x128xf32>
    %2 = tpu.matmul %0, %1, %cst {dimension_numbers = #tpu.dot_dimension_numbers<[1], [0], [0], [1], [0, 0, 1, 1], [], []>} : vector<64x32xbf16>, vector<32x128xbf16>, vector<64x128xf32> -> vector<64x128xf32>
    %c0_3 = arith.constant 0 : index
    %c0_4 = arith.constant 0 : index
    %3 = vector.load %arg4[%c0_3, %c0_4] : memref<1x128xf32, #tpu.memory_space<vmem>>, vector<1x128xf32>
    %4 = vector.broadcast %3 : vector<1x128xf32> to vector<64x128xf32>
    %5 = arith.addf %2, %4 : vector<64x128xf32>
    %6 = vector.shape_cast %5 : vector<64x128xf32> to vector<8x8x128xf32>
    %c0_5 = arith.constant 0 : index
    %c0_6 = arith.constant 0 : index
    %c0_7 = arith.constant 0 : index
    %7 = vector.load %arg15[%c0_5, %c0_6, %c0_7] : memref<8x8x128xf32, #tpu.memory_space<vmem>>, vector<8x8x128xf32>
    tpu.vector_store %arg15[%c0_5, %c0_6, %c0_7], %6 {strides = array<i32>} : memref<8x8x128xf32, #tpu.memory_space<vmem>>, vector<8x8x128xf32>,
    %c0_8 = arith.constant 0 : index
    %c0_9 = arith.constant 0 : index
    %8 = vector.load %arg5[%c0_8, %c0_9] : memref<32x128xbf16, #tpu.memory_space<vmem>>, vector<32x128xbf16>
    %cst_10 = arith.constant dense<0.000000e+00> : vector<64x128xf32>
    %9 = tpu.matmul %0, %8, %cst_10 {dimension_numbers = #tpu.dot_dimension_numbers<[1], [0], [0], [1], [0, 0, 1, 1], [], []>} : vector<64x32xbf16>, vector<32x128xbf16>, vector<64x128xf32> -> vector<64x128xf32>
    %c0_11 = arith.constant 0 : index
    %c0_12 = arith.constant 0 : index
    %10 = vector.load %arg7[%c0_11, %c0_12] : memref<1x128xf32, #tpu.memory_space<vmem>>, vector<1x128xf32>
    %11 = vector.broadcast %10 : vector<1x128xf32> to vector<64x128xf32>
    %12 = arith.addf %9, %11 : vector<64x128xf32>
    %13 = vector.shape_cast %12 : vector<64x128xf32> to vector<8x8x128xf32>
    %c0_13 = arith.constant 0 : index
    %c0_14 = arith.constant 0 : index
    %c0_15 = arith.constant 0 : index
    %14 = vector.load %arg16[%c0_13, %c0_14, %c0_15] : memref<8x8x128xf32, #tpu.memory_space<vmem>>, vector<8x8x128xf32>
    tpu.vector_store %arg16[%c0_13, %c0_14, %c0_15], %13 {strides = array<i32>} : memref<8x8x128xf32, #tpu.memory_space<vmem>>, vector<8x8x128xf32>,
    %c0_16 = arith.constant 0 : index
    %c0_17 = arith.constant 0 : index
    %15 = vector.load %arg3[%c0_16, %c0_17] : memref<32x128xbf16, #tpu.memory_space<vmem>>, vector<32x128xbf16>
    %c0_18 = arith.constant 0 : index
    %c0_19 = arith.constant 0 : index
    %16 = vector.load %arg6[%c0_18, %c0_19] : memref<32x128xbf16, #tpu.memory_space<vmem>>, vector<32x128xbf16>
    %c0_20 = arith.constant 0 : index
    %c0_21 = arith.constant 0 : index
    %17 = vector.load %arg0[%c0_20, %c0_21] : memref<8x1xi32, #tpu.memory_space<vmem>>, vector<8x1xi32>
    %cst_22 = arith.constant 0.000000e+00 : f32
    %18 = vector.broadcast %cst_22 : f32 to vector<8x32xf32>
    %c0_i32 = arith.constant 0 : i32
    %c8_i32 = arith.constant 8 : i32
    %19 = arith.addi %c0_i32, %c8_i32 : i32
    %c1_i32 = arith.constant 1 : i32
    %20:4 = scf.for %arg19 = %c0_i32 to %19 step %c1_i32 iter_args(%arg20 = %18, %arg21 = %18, %arg22 = %18, %arg23 = %18) -> (vector<8x32xf32>, vector<8x32xf32>, vector<8x32xf32>, vector<8x32xf32>)  : i32 {
      %c7_i32 = arith.constant 7 : i32
      %41 = arith.subi %c7_i32, %arg19 : i32
      %42 = arith.index_cast %arg19 : i32 to index
      %c0_49 = arith.constant 0 : index
      %c0_50 = arith.constant 0 : index
      %43 = vector.load %arg15[%42, %c0_49, %c0_50] : memref<8x8x128xf32, #tpu.memory_space<vmem>>, vector<1x8x128xf32>
      %44 = vector.shape_cast %43 : vector<1x8x128xf32> to vector<8x128xf32>
      %45 = arith.truncf %arg20 : vector<8x32xf32> to vector<8x32xbf16>
      %cst_51 = arith.constant dense<0.000000e+00> : vector<8x128xf32>
      %46 = tpu.matmul %45, %15, %cst_51 {dimension_numbers = #tpu.dot_dimension_numbers<[1], [0], [0], [1], [0, 0, 1, 1], [], []>} : vector<8x32xbf16>, vector<32x128xbf16>, vector<8x128xf32> -> vector<8x128xf32>
      %47 = arith.addf %44, %46 : vector<8x128xf32>
      %48 = arith.index_cast %41 : i32 to index
      %c0_52 = arith.constant 0 : index
      %c0_53 = arith.constant 0 : index
      %49 = vector.load %arg16[%48, %c0_52, %c0_53] : memref<8x8x128xf32, #tpu.memory_space<vmem>>, vector<1x8x128xf32>
      %50 = vector.shape_cast %49 : vector<1x8x128xf32> to vector<8x128xf32>
      %51 = arith.truncf %arg22 : vector<8x32xf32> to vector<8x32xbf16>
      %cst_54 = arith.constant dense<0.000000e+00> : vector<8x128xf32>
      %52 = tpu.matmul %51, %16, %cst_54 {dimension_numbers = #tpu.dot_dimension_numbers<[1], [0], [0], [1], [0, 0, 1, 1], [], []>} : vector<8x32xbf16>, vector<32x128xbf16>, vector<8x128xf32> -> vector<8x128xf32>
      %53 = arith.addf %50, %52 : vector<8x128xf32>
      %54 = vector.broadcast %arg19 : i32 to vector<8x1xi32>
      %55 = arith.cmpi sgt, %17, %54 : vector<8x1xi32>
      %56 = vector.extract_strided_slice %47 {offsets = [0, 0], sizes = [8, 32], strides = [1, 1]} : vector<8x128xf32> to vector<8x32xf32>
      %cst_55 = arith.constant 5.000000e-01 : f32
      %57 = vector.broadcast %cst_55 : f32 to vector<8x32xf32>
      %58 = arith.mulf %57, %56 : vector<8x32xf32>
      %59 = math.tanh %58 : vector<8x32xf32>
      %cst_56 = arith.constant 5.000000e-01 : f32
      %60 = vector.broadcast %cst_56 : f32 to vector<8x32xf32>
      %61 = arith.mulf %60, %59 : vector<8x32xf32>
      %cst_57 = arith.constant 5.000000e-01 : f32
      %62 = vector.broadcast %cst_57 : f32 to vector<8x32xf32>
      %63 = arith.addf %61, %62 : vector<8x32xf32>
      %64 = vector.extract_strided_slice %47 {offsets = [0, 32], sizes = [8, 32], strides = [1, 1]} : vector<8x128xf32> to vector<8x32xf32>
      %cst_58 = arith.constant 5.000000e-01 : f32
      %65 = vector.broadcast %cst_58 : f32 to vector<8x32xf32>
      %66 = arith.mulf %65, %64 : vector<8x32xf32>
      %67 = math.tanh %66 : vector<8x32xf32>
      %cst_59 = arith.constant 5.000000e-01 : f32
      %68 = vector.broadcast %cst_59 : f32 to vector<8x32xf32>
      %69 = arith.mulf %68, %67 : vector<8x32xf32>
      %cst_60 = arith.constant 5.000000e-01 : f32
      %70 = vector.broadcast %cst_60 : f32 to vector<8x32xf32>
      %71 = arith.addf %69, %70 : vector<8x32xf32>
      %72 = vector.extract_strided_slice %47 {offsets = [0, 64], sizes = [8, 32], strides = [1, 1]} : vector<8x128xf32> to vector<8x32xf32>
      %73 = math.tanh %72 : vector<8x32xf32>
      %74 = vector.extract_strided_slice %47 {offsets = [0, 96], sizes = [8, 32], strides = [1, 1]} : vector<8x128xf32> to vector<8x32xf32>
      %cst_61 = arith.constant 5.000000e-01 : f32
      %75 = vector.broadcast %cst_61 : f32 to vector<8x32xf32>
      %76 = arith.mulf %75, %74 : vector<8x32xf32>
      %77 = math.tanh %76 : vector<8x32xf32>
      %cst_62 = arith.constant 5.000000e-01 : f32
      %78 = vector.broadcast %cst_62 : f32 to vector<8x32xf32>
      %79 = arith.mulf %78, %77 : vector<8x32xf32>
      %cst_63 = arith.constant 5.000000e-01 : f32
      %80 = vector.broadcast %cst_63 : f32 to vector<8x32xf32>
      %81 = arith.addf %79, %80 : vector<8x32xf32>
      %82 = arith.mulf %71, %arg21 : vector<8x32xf32>
      %83 = arith.mulf %63, %73 : vector<8x32xf32>
      %84 = arith.addf %82, %83 : vector<8x32xf32>
      %85 = math.tanh %84 : vector<8x32xf32>
      %86 = arith.mulf %81, %85 : vector<8x32xf32>
      %cst_64 = arith.constant 0.000000e+00 : f32
      %87 = vector.shape_cast %55 : vector<8x1xi1> to vector<8x1xi1>
      %88 = vector.broadcast %87 : vector<8x1xi1> to vector<8x32xi1>
      %89 = vector.broadcast %cst_64 : f32 to vector<8x32xf32>
      %90 = arith.select %88, %86, %89 : vector<8x32xi1>, vector<8x32xf32>
      %91 = vector.shape_cast %55 : vector<8x1xi1> to vector<8x1xi1>
      %92 = vector.broadcast %91 : vector<8x1xi1> to vector<8x32xi1>
      %93 = arith.select %92, %86, %arg20 : vector<8x32xi1>, vector<8x32xf32>
      %94 = vector.shape_cast %55 : vector<8x1xi1> to vector<8x1xi1>
      %95 = vector.broadcast %94 : vector<8x1xi1> to vector<8x32xi1>
      %96 = arith.select %95, %84, %arg21 : vector<8x32xi1>, vector<8x32xf32>
      %97 = vector.broadcast %41 : i32 to vector<8x1xi32>
      %98 = arith.cmpi sgt, %17, %97 : vector<8x1xi32>
      %99 = vector.extract_strided_slice %53 {offsets = [0, 0], sizes = [8, 32], strides = [1, 1]} : vector<8x128xf32> to vector<8x32xf32>
      %cst_65 = arith.constant 5.000000e-01 : f32
      %100 = vector.broadcast %cst_65 : f32 to vector<8x32xf32>
      %101 = arith.mulf %100, %99 : vector<8x32xf32>
      %102 = math.tanh %101 : vector<8x32xf32>
      %cst_66 = arith.constant 5.000000e-01 : f32
      %103 = vector.broadcast %cst_66 : f32 to vector<8x32xf32>
      %104 = arith.mulf %103, %102 : vector<8x32xf32>
      %cst_67 = arith.constant 5.000000e-01 : f32
      %105 = vector.broadcast %cst_67 : f32 to vector<8x32xf32>
      %106 = arith.addf %104, %105 : vector<8x32xf32>
      %107 = vector.extract_strided_slice %53 {offsets = [0, 32], sizes = [8, 32], strides = [1, 1]} : vector<8x128xf32> to vector<8x32xf32>
      %cst_68 = arith.constant 5.000000e-01 : f32
      %108 = vector.broadcast %cst_68 : f32 to vector<8x32xf32>
      %109 = arith.mulf %108, %107 : vector<8x32xf32>
      %110 = math.tanh %109 : vector<8x32xf32>
      %cst_69 = arith.constant 5.000000e-01 : f32
      %111 = vector.broadcast %cst_69 : f32 to vector<8x32xf32>
      %112 = arith.mulf %111, %110 : vector<8x32xf32>
      %cst_70 = arith.constant 5.000000e-01 : f32
      %113 = vector.broadcast %cst_70 : f32 to vector<8x32xf32>
      %114 = arith.addf %112, %113 : vector<8x32xf32>
      %115 = vector.extract_strided_slice %53 {offsets = [0, 64], sizes = [8, 32], strides = [1, 1]} : vector<8x128xf32> to vector<8x32xf32>
      %116 = math.tanh %115 : vector<8x32xf32>
      %117 = vector.extract_strided_slice %53 {offsets = [0, 96], sizes = [8, 32], strides = [1, 1]} : vector<8x128xf32> to vector<8x32xf32>
      %cst_71 = arith.constant 5.000000e-01 : f32
      %118 = vector.broadcast %cst_71 : f32 to vector<8x32xf32>
      %119 = arith.mulf %118, %117 : vector<8x32xf32>
      %120 = math.tanh %119 : vector<8x32xf32>
      %cst_72 = arith.constant 5.000000e-01 : f32
      %121 = vector.broadcast %cst_72 : f32 to vector<8x32xf32>
      %122 = arith.mulf %121, %120 : vector<8x32xf32>
      %cst_73 = arith.constant 5.000000e-01 : f32
      %123 = vector.broadcast %cst_73 : f32 to vector<8x32xf32>
      %124 = arith.addf %122, %123 : vector<8x32xf32>
      %125 = arith.mulf %114, %arg23 : vector<8x32xf32>
      %126 = arith.mulf %106, %116 : vector<8x32xf32>
      %127 = arith.addf %125, %126 : vector<8x32xf32>
      %128 = math.tanh %127 : vector<8x32xf32>
      %129 = arith.mulf %124, %128 : vector<8x32xf32>
      %cst_74 = arith.constant 0.000000e+00 : f32
      %130 = vector.shape_cast %98 : vector<8x1xi1> to vector<8x1xi1>
      %131 = vector.broadcast %130 : vector<8x1xi1> to vector<8x32xi1>
      %132 = vector.broadcast %cst_74 : f32 to vector<8x32xf32>
      %133 = arith.select %131, %129, %132 : vector<8x32xi1>, vector<8x32xf32>
      %134 = vector.shape_cast %98 : vector<8x1xi1> to vector<8x1xi1>
      %135 = vector.broadcast %134 : vector<8x1xi1> to vector<8x32xi1>
      %136 = arith.select %135, %129, %arg22 : vector<8x32xi1>, vector<8x32xf32>
      %137 = vector.shape_cast %98 : vector<8x1xi1> to vector<8x1xi1>
      %138 = vector.broadcast %137 : vector<8x1xi1> to vector<8x32xi1>
      %139 = arith.select %138, %127, %arg23 : vector<8x32xi1>, vector<8x32xf32>
      %140 = arith.index_cast %arg19 : i32 to index
      %c0_75 = arith.constant 0 : index
      %c0_76 = arith.constant 0 : index
      %141 = vector.load %arg17[%140, %c0_75, %c0_76] : memref<8x8x32xf32, #tpu.memory_space<vmem>>, vector<1x8x32xf32>
      %142 = vector.shape_cast %141 : vector<1x8x32xf32> to vector<8x32xf32>
      %143 = vector.shape_cast %90 : vector<8x32xf32> to vector<1x8x32xf32>
      tpu.vector_store %arg17[%140, %c0_75, %c0_76], %143 {strides = array<i32>} : memref<8x8x32xf32, #tpu.memory_space<vmem>>, vector<1x8x32xf32>,
      %144 = arith.index_cast %41 : i32 to index
      %c0_77 = arith.constant 0 : index
      %c0_78 = arith.constant 0 : index
      %145 = vector.load %arg18[%144, %c0_77, %c0_78] : memref<8x8x32xf32, #tpu.memory_space<vmem>>, vector<1x8x32xf32>
      %146 = vector.shape_cast %145 : vector<1x8x32xf32> to vector<8x32xf32>
      %147 = vector.shape_cast %133 : vector<8x32xf32> to vector<1x8x32xf32>
      tpu.vector_store %arg18[%144, %c0_77, %c0_78], %147 {strides = array<i32>} : memref<8x8x32xf32, #tpu.memory_space<vmem>>, vector<1x8x32xf32>,
      scf.yield %93, %96, %136, %139 : vector<8x32xf32>, vector<8x32xf32>, vector<8x32xf32>, vector<8x32xf32>
    }
    %c8_i32_23 = arith.constant 8 : i32
    %c0_24 = arith.constant 0 : index
    %c0_25 = arith.constant 0 : index
    %c0_26 = arith.constant 0 : index
    %21 = vector.load %arg17[%c0_24, %c0_25, %c0_26] : memref<8x8x32xf32, #tpu.memory_space<vmem>>, vector<8x8x32xf32>
    %c0_27 = arith.constant 0 : index
    %c0_28 = arith.constant 0 : index
    %c0_29 = arith.constant 0 : index
    %22 = vector.load %arg18[%c0_27, %c0_28, %c0_29] : memref<8x8x32xf32, #tpu.memory_space<vmem>>, vector<8x8x32xf32>
    %23 = tpu.concatenate %21, %22 in 2 : vector<8x8x32xf32>, vector<8x8x32xf32> -> vector<8x8x64xf32>
    %c0_30 = arith.constant 0 : index
    %c0_31 = arith.constant 0 : index
    %c0_32 = arith.constant 0 : index
    %24 = vector.load %arg12[%c0_30, %c0_31, %c0_32] : memref<8x8x64xf32, #tpu.memory_space<vmem>>, vector<8x8x64xf32>
    tpu.vector_store %arg12[%c0_30, %c0_31, %c0_32], %23 {strides = array<i32>} : memref<8x8x64xf32, #tpu.memory_space<vmem>>, vector<8x8x64xf32>,
    %25 = arith.truncf %20#0 : vector<8x32xf32> to vector<8x32xbf16>
    %c0_33 = arith.constant 0 : index
    %c0_34 = arith.constant 0 : index
    %26 = vector.load %arg8[%c0_33, %c0_34] : memref<32x32xbf16, #tpu.memory_space<vmem>>, vector<32x32xbf16>
    %cst_35 = arith.constant dense<0.000000e+00> : vector<8x32xf32>
    %27 = tpu.matmul %25, %26, %cst_35 {dimension_numbers = #tpu.dot_dimension_numbers<[1], [0], [0], [1], [0, 0, 1, 1], [], []>} : vector<8x32xbf16>, vector<32x32xbf16>, vector<8x32xf32> -> vector<8x32xf32>
    %28 = arith.truncf %20#2 : vector<8x32xf32> to vector<8x32xbf16>
    %c0_36 = arith.constant 0 : index
    %c0_37 = arith.constant 0 : index
    %29 = vector.load %arg9[%c0_36, %c0_37] : memref<32x32xbf16, #tpu.memory_space<vmem>>, vector<32x32xbf16>
    %cst_38 = arith.constant dense<0.000000e+00> : vector<8x32xf32>
    %30 = tpu.matmul %28, %29, %cst_38 {dimension_numbers = #tpu.dot_dimension_numbers<[1], [0], [0], [1], [0, 0, 1, 1], [], []>} : vector<8x32xbf16>, vector<32x32xbf16>, vector<8x32xf32> -> vector<8x32xf32>
    %31 = arith.addf %27, %30 : vector<8x32xf32>
    %c0_39 = arith.constant 0 : index
    %c0_40 = arith.constant 0 : index
    %32 = vector.load %arg13[%c0_39, %c0_40] : memref<8x32xf32, #tpu.memory_space<vmem>>, vector<8x32xf32>
    tpu.vector_store %arg13[%c0_39, %c0_40], %31 {strides = array<i32>} : memref<8x32xf32, #tpu.memory_space<vmem>>, vector<8x32xf32>,
    %33 = arith.truncf %20#1 : vector<8x32xf32> to vector<8x32xbf16>
    %c0_41 = arith.constant 0 : index
    %c0_42 = arith.constant 0 : index
    %34 = vector.load %arg10[%c0_41, %c0_42] : memref<32x32xbf16, #tpu.memory_space<vmem>>, vector<32x32xbf16>
    %cst_43 = arith.constant dense<0.000000e+00> : vector<8x32xf32>
    %35 = tpu.matmul %33, %34, %cst_43 {dimension_numbers = #tpu.dot_dimension_numbers<[1], [0], [0], [1], [0, 0, 1, 1], [], []>} : vector<8x32xbf16>, vector<32x32xbf16>, vector<8x32xf32> -> vector<8x32xf32>
    %36 = arith.truncf %20#3 : vector<8x32xf32> to vector<8x32xbf16>
    %c0_44 = arith.constant 0 : index
    %c0_45 = arith.constant 0 : index
    %37 = vector.load %arg11[%c0_44, %c0_45] : memref<32x32xbf16, #tpu.memory_space<vmem>>, vector<32x32xbf16>
    %cst_46 = arith.constant dense<0.000000e+00> : vector<8x32xf32>
    %38 = tpu.matmul %36, %37, %cst_46 {dimension_numbers = #tpu.dot_dimension_numbers<[1], [0], [0], [1], [0, 0, 1, 1], [], []>} : vector<8x32xbf16>, vector<32x32xbf16>, vector<8x32xf32> -> vector<8x32xf32>
    %39 = arith.addf %35, %38 : vector<8x32xf32>
    %c0_47 = arith.constant 0 : index
    %c0_48 = arith.constant 0 : index
    %40 = vector.load %arg14[%c0_47, %c0_48] : memref<8x32xf32, #tpu.memory_space<vmem>>, vector<8x32xf32>
    tpu.vector_store %arg14[%c0_47, %c0_48], %39 {strides = array<i32>} : memref<8x32xf32, #tpu.memory_space<vmem>>, vector<8x32xf32>,
    return
  }
}

</mosaic_0001>

<llo_original>
// kernel: tpu_custom_call.1
$region0: #{tpu_custom_call.1}
  #allocation0 [shape = 'u32[]', space=smem, size = 0x4, offset = 0x4, fixed_abs, tag = 'smem constant byte address 0x4 - core index']
  #allocation1 [shape = 'u32[144,128]{1,0:T(1,128)}', space=vmem, size = 0x12000, scoped, tag = 'internal scratch']
  #allocation2 [shape = 'f32[8,8,128]{2,1,0:T(8,128)}', space=vmem, size = 0x8000, scoped, tag = 'scratch operand']
  #allocation3 [shape = 'f32[8,8,128]{2,1,0:T(8,128)}', space=vmem, size = 0x8000, scoped, tag = 'scratch operand']
  #allocation4 [shape = 'f32[8,8,32]{2,1,0:T(8,128)}', space=vmem, size = 0x8000, scoped, tag = 'scratch operand']
  #allocation5 [shape = 'f32[8,8,32]{2,1,0:T(8,128)}', space=vmem, size = 0x8000, scoped, tag = 'scratch operand']
  %s0 = inlined_call_operand.vmem [shape: s32[8,1], index: 0, kind: input, shape index: {}]
  %s1 = inlined_call_operand.vmem [shape: bf16[64,32], index: 1, kind: input, shape index: {}]
  %s2 = inlined_call_operand.vmem [shape: bf16[32,128], index: 2, kind: input, shape index: {}]
  %s3 = inlined_call_operand.vmem [shape: bf16[32,128], index: 3, kind: input, shape index: {}]
  %s4 = inlined_call_operand.vmem [shape: f32[1,128], index: 4, kind: input, shape index: {}]
  %s5 = inlined_call_operand.vmem [shape: bf16[32,128], index: 5, kind: input, shape index: {}]
  %s6 = inlined_call_operand.vmem [shape: bf16[32,128], index: 6, kind: input, shape index: {}]
  %s7 = inlined_call_operand.vmem [shape: f32[1,128], index: 7, kind: input, shape index: {}]
  %s8 = inlined_call_operand.vmem [shape: bf16[32,32], index: 8, kind: input, shape index: {}]
  %s9 = inlined_call_operand.hbm [shape: bf16[32,32], index: 9, kind: input, shape index: {}]
  %s10 = inlined_call_operand.hbm [shape: bf16[32,32], index: 10, kind: input, shape index: {}]
  %s11 = inlined_call_operand.vmem [shape: bf16[32,32], index: 11, kind: input, shape index: {}]
  %s12 = inlined_call_operand.hbm [shape: f32[8,8,64], index: 12, kind: output, shape index: {0}]
  %s13 = inlined_call_operand.hbm [shape: f32[8,32], index: 13, kind: output, shape index: {1}]
  %s14 = inlined_call_operand.hbm [shape: f32[8,32], index: 14, kind: output, shape index: {2}]
  %15 = xla_tuple %s12, %s13, %s14
  %s16 = sld [smem:[#allocation0]]
  $region89: #{tpu_custom_call.1} parent=0
    _
  %s18 = ssub.s32 1, %s16
  %s19 = scalar_select 0, %s18, %s16
  $region1: #{tpu_custom_call.1} parent=0
    #allocation6 [shape = 'u8[8192]{0}', space=vmem, size = 0x2000, scoped, tag = 'input window, operand 9, single buffered']
    #allocation7 [shape = 's32[1]{0}', space=sflag, size = 0x4, scoped, tag = 'scoped memory for tpu_custom_call.1']
    #allocation8 [shape = 's32[1]{0}', space=sflag, size = 0x4, scoped, tag = 'scoped memory for tpu_custom_call.1']
    #allocation9 [shape = 'u8[8192]{0}', space=vmem, size = 0x2000, scoped, tag = 'input window, operand 10, single buffered']
    #allocation10 [shape = 's32[1]{0}', space=sflag, size = 0x4, scoped, tag = 'scoped memory for tpu_custom_call.1']
    #allocation11 [shape = 'u8[32768]{0}', space=vmem, size = 0x8000, scoped, tag = 'output window, operand 0, single buffered']
    #allocation12 [shape = 'u8[4096]{0}', space=vmem, size = 0x1000, scoped, tag = 'output window, operand 1, single buffered']
    #allocation13 [shape = 's32[1]{0}', space=sflag, size = 0x4, scoped, tag = 'scoped memory for tpu_custom_call.1']
    #allocation14 [shape = 'u8[4096]{0}', space=vmem, size = 0x1000, scoped, tag = 'output window, operand 2, single buffered']
    %20 = vsyncpa [#allocation7], 0
    %21 = vsyncpa [#allocation10], 0
    %22 = vsyncpa [#allocation8], 0
    %23 = vsyncpa [#allocation13], 0
    // Predicated region
    $region2: #{tpu_custom_call.1} parent=1 // pred_check
      _
    $region3: #{tpu_custom_call.1} parent=1 // pred_check_branch
      %25 = sbr.rel (0) target = $region5
    $region4: #{tpu_custom_call.1} parent=1 // pred_region
      _
    $region5: #{tpu_custom_call.1} parent=1 // pred_fallthru
      _
    // Predicated region
    $region6: #{tpu_custom_call.1} parent=1 // pred_check
      _
    $region7: #{tpu_custom_call.1} parent=1 // pred_check_branch
      %27 = sbr.rel (0) target = $region9
    $region8: #{tpu_custom_call.1} parent=1 // pred_region
      _
    $region9: #{tpu_custom_call.1} parent=1 // pred_fallthru
      _
    // Predicated region
    $region10: #{tpu_custom_call.1} parent=1 // pred_check
      _
    $region11: #{tpu_custom_call.1} parent=1 // pred_check_branch
      %29 = sbr.rel (0) target = $region13
    $region12: #{tpu_custom_call.1} parent=1 // pred_region
      _
    $region13: #{tpu_custom_call.1} parent=1 // pred_fallthru
      _
    // Predicated region
    $region14: #{tpu_custom_call.1} parent=1 // pred_check
      _
    $region15: #{tpu_custom_call.1} parent=1 // pred_check_branch
      %31 = sbr.rel (0) target = $region17
    $region16: #{tpu_custom_call.1} parent=1 // pred_region
      _
    $region17: #{tpu_custom_call.1} parent=1 // pred_fallthru
      _
    // Predicated region
    $region18: #{tpu_custom_call.1} parent=1 // pred_check
      _
    $region19: #{tpu_custom_call.1} parent=1 // pred_check_branch
      %33 = sbr.rel (0) target = $region21
    $region20: #{tpu_custom_call.1} parent=1 // pred_region
      _
    $region21: #{tpu_custom_call.1} parent=1 // pred_fallthru
      _
    // Predicated region
    $region22: #{tpu_custom_call.1} parent=1 // pred_check
      _
    $region23: #{tpu_custom_call.1} parent=1 // pred_check_branch
      %35 = sbr.rel (0) target = $region25
    $region24: #{tpu_custom_call.1} parent=1 // pred_region
      _
    $region25: #{tpu_custom_call.1} parent=1 // pred_fallthru
      _
    // Predicated region
    $region26: #{tpu_custom_call.1} parent=1 // pred_check
      _
    $region27: #{tpu_custom_call.1} parent=1 // pred_check_branch
      %37 = sbr.rel (0) target = $region29
    $region28: #{tpu_custom_call.1} parent=1 // pred_region
      _
    $region29: #{tpu_custom_call.1} parent=1 // pred_fallthru
      _
    // Predicated region
    $region30: #{tpu_custom_call.1} parent=1 // pred_check
      _
    $region31: #{tpu_custom_call.1} parent=1 // pred_check_branch
      %39 = sbr.rel (0) target = $region33
    $region32: #{tpu_custom_call.1} parent=1 // pred_region
      _
    $region33: #{tpu_custom_call.1} parent=1 // pred_fallthru
      _
    // Predicated region
    $region34: #{tpu_custom_call.1} parent=1 // pred_check
      _
    $region35: #{tpu_custom_call.1} parent=1 // pred_check_branch
      %41 = sbr.rel (0) target = $region37
    $region36: #{tpu_custom_call.1} parent=1 // pred_region
      _
    $region37: #{tpu_custom_call.1} parent=1 // pred_fallthru
      _
    // Predicated region
    $region38: #{tpu_custom_call.1} parent=1 // pred_check
      _
    $region39: #{tpu_custom_call.1} parent=1 // pred_check_branch
      %43 = sbr.rel (0) target = $region41
    $region40: #{tpu_custom_call.1} parent=1 // pred_region
      %s45 = ssub.s32 256, 256
      %46 = vsyncadd [#allocation7], %s45
      %s47 = sshll.u32 [#allocation6], 4
      %s48 = int_to_ptr.vmem [resolvable:$true] %s47
      %53 = dma.hbm_to_vmem [thread:$0]  %s9, 256, %s48, [#allocation7], 64, 64, 4
    $region41: #{tpu_custom_call.1} parent=1 // pred_fallthru
      _
    // Predicated region
    $region42: #{tpu_custom_call.1} parent=1 // pred_check
      _
    $region43: #{tpu_custom_call.1} parent=1 // pred_check_branch
      %55 = sbr.rel (0) target = $region45
    $region44: #{tpu_custom_call.1} parent=1 // pred_region
      %s57 = ssub.s32 256, 256
      %58 = vsyncadd [#allocation10], %s57
      %s59 = sshll.u32 [#allocation9], 4
      %s60 = int_to_ptr.vmem [resolvable:$true] %s59
      %65 = dma.hbm_to_vmem [thread:$0]  %s10, 256, %s60, [#allocation10], 64, 64, 4
    $region45: #{tpu_custom_call.1} parent=1 // pred_fallthru
      _
    // Predicated region
    $region46: #{tpu_custom_call.1} parent=1 // pred_check
      _
    $region47: #{tpu_custom_call.1} parent=1 // pred_check_branch
      %67 = sbr.rel (0) target = $region49
    $region48: #{tpu_custom_call.1} parent=1 // pred_region
      _
    $region49: #{tpu_custom_call.1} parent=1 // pred_fallthru
      _
    // Predicated region
    $region50: #{tpu_custom_call.1} parent=1 // pred_check
      _
    $region51: #{tpu_custom_call.1} parent=1 // pred_check_branch
      %69 = sbr.rel (0) target = $region53
    $region52: #{tpu_custom_call.1} parent=1 // pred_region
      %70 = dma.done [#allocation7], 256
    $region53: #{tpu_custom_call.1} parent=1 // pred_fallthru
      _
    // Predicated region
    $region54: #{tpu_custom_call.1} parent=1 // pred_check
      _
    $region55: #{tpu_custom_call.1} parent=1 // pred_check_branch
      %72 = sbr.rel (0) target = $region57
    $region56: #{tpu_custom_call.1} parent=1 // pred_region
      %73 = dma.done [#allocation10], 256
    $region57: #{tpu_custom_call.1} parent=1 // pred_fallthru
      _
    %v75 = vld [vmem:[%s1] sm:$0xf]
    %v76 = vld [vmem:[%s1 + $0x4] sm:$0xf]
    %v77 = vld [vmem:[%s1 + $0x8] sm:$0xf]
    %v78 = vld [vmem:[%s1 + $0xc] sm:$0xf]
    %v79 = vld [vmem:[%s1 + $0x10] sm:$0xf]
    %v80 = vld [vmem:[%s1 + $0x14] sm:$0xf]
    %v81 = vld [vmem:[%s1 + $0x18] sm:$0xf]
    %v82 = vld [vmem:[%s1 + $0x1c] sm:$0xf]
    %v83 = vld [vmem:[%s2] sm:$0xf]
    %v84 = vld [vmem:[%s2 + $0x4] sm:$0xf]
    %v85 = vld [vmem:[%s2 + $0x8] sm:$0xf]
    %v86 = vld [vmem:[%s2 + $0xc] sm:$0xf]
    %v87 = vld [vmem:[%s4] sm:$0x1]
    %v89 = vlaneseq
    %v90 = vshrl.u32 %v89, 7
    %v91 = vsub.s32 0, %v90
    %v92 = vrot.slane %v87, %v91
    %v102 = vunpack.c.l.b16 %v75
    %v103 = vunpack.c.l.b16 %v76
    %v104 = vunpack.c.l.b16 %v77
    %v105 = vunpack.c.l.b16 %v78
    %v106 = vunpack.c.l.b16 %v79
    %v107 = vunpack.c.l.b16 %v80
    %v108 = vunpack.c.l.b16 %v81
    %v109 = vunpack.c.l.b16 %v82
    %v110 = vpack.c.b16 %v103, %v102
    %v111 = vpack.c.b16 %v105, %v104
    %v112 = vpack.c.b16 %v107, %v106
    %v113 = vpack.c.b16 %v109, %v108
    %v118 = vunpack.c.l.b16 %v83
    %v119 = vunpack.c.l.b16 %v84
    %v120 = vunpack.c.l.b16 %v85
    %v121 = vunpack.c.l.b16 %v86
    %v122 = vpack.c.b16 %v119, %v118
    %v123 = vpack.c.b16 %v121, %v120
    %vm126 = vcmask 261120
    %v128 = vsel %vm126, %v110, 0
    %v131 = vsel %vm126, %v111, 0
    %v134 = vsel %vm126, %v112, 0
    %v137 = vsel %vm126, %v113, 0
    %139 = vmatprep.subr.bf16.mxu0 0
    %140 = vmatpush1.bf16.msra.mxu0 %v122
    %141 = vmatprep.subr.bf16.mxu0 0
    %142 = vmatpush1.bf16.msra.mxu0 %v123
    %143 = vmatprep.subr.bf16.mxu0 0
    %144 = vmatpush1.bf16.msra.mxu0 0
    %145 = vmatprep.subr.bf16.mxu0 0
    %146 = vmatpush1.bf16.msra.mxu0 0
    %147 = vmatprep.subr.bf16.mxu0 0
    %148 = vmatpush1.bf16.msra.mxu0 0
    %149 = vmatprep.subr.bf16.mxu0 0
    %150 = vmatpush1.bf16.msra.mxu0 0
    %151 = vmatprep.subr.bf16.mxu0 0
    %152 = vmatpush1.bf16.msra.mxu0 0
    %153 = vmatprep.subr.bf16.mxu0 0
    %154 = vmatpush1.bf16.msra.mxu0 0
    %155 = vmatprep.subr.bf16.mxu0 0
    %156 = vmatpush1.bf16.msra.mxu0 0
    %157 = vmatprep.subr.bf16.mxu0 0
    %158 = vmatpush1.bf16.msra.mxu0 0
    %159 = vmatprep.subr.bf16.mxu0 0
    %160 = vmatpush1.bf16.msra.mxu0 0
    %161 = vmatprep.subr.bf16.mxu0 0
    %162 = vmatpush1.bf16.msra.mxu0 0
    %163 = vmatprep.subr.bf16.mxu0 0
    %164 = vmatpush1.bf16.msra.mxu0 0
    %165 = vmatprep.subr.bf16.mxu0 0
    %166 = vmatpush1.bf16.msra.mxu0 0
    %167 = vmatprep.subr.bf16.mxu0 0
    %168 = vmatpush1.bf16.msra.mxu0 0
    %169 = vmatprep.subr.bf16.mxu0 0
    %170 = vmatpush1.bf16.msra.mxu0 0
    %171 = vmatprep.mubr.bf16.mxu0 0
    %172 = vmatmul.mubr.bf16.gmra.mrb[0].mxu0 %v128
    %v173 = vpop.f32.mrb[0].mxu0
    %v174 = vadd.f32 %v92, %v173
    %v175 = vpop.f32.mrb[0].mxu0
    %v176 = vpop.f32.mrb[0].mxu0
    %v177 = vadd.f32 %v92, %v176
    %v178 = vpop.f32.mrb[0].mxu0
    %179 = vmatprep.mubr.bf16.mxu0 0
    %180 = vmatmul.mubr.bf16.gmra.mrb[0].mxu0 %v131
    %v181 = vpop.f32.mrb[0].mxu0
    %v182 = vadd.f32 %v92, %v181
    %v183 = vpop.f32.mrb[0].mxu0
    %v184 = vpop.f32.mrb[0].mxu0
    %v185 = vadd.f32 %v92, %v184
    %v186 = vpop.f32.mrb[0].mxu0
    %187 = vmatprep.mubr.bf16.mxu0 0
    %188 = vmatmul.mubr.bf16.gmra.mrb[0].mxu0 %v134
    %v189 = vpop.f32.mrb[0].mxu0
    %v190 = vadd.f32 %v92, %v189
    %v191 = vpop.f32.mrb[0].mxu0
    %v192 = vpop.f32.mrb[0].mxu0
    %v193 = vadd.f32 %v92, %v192
    %v194 = vpop.f32.mrb[0].mxu0
    %195 = vmatprep.mubr.bf16.mxu0 0
    %196 = vmatmul.mubr.bf16.gmra.mrb[0].mxu0 %v137
    %v197 = vpop.f32.mrb[0].mxu0
    %v198 = vadd.f32 %v92, %v197
    %v199 = vpop.f32.mrb[0].mxu0
    %v200 = vpop.f32.mrb[0].mxu0
    %v201 = vadd.f32 %v92, %v200
    %v202 = vpop.f32.mrb[0].mxu0
    %203 = vdwg.mxu0
    %204 = vst [vmem:[#allocation2] sm:$0xff] %v174
    %205 = vst [vmem:[#allocation2 + $0x8] sm:$0xff] %v177
    %206 = vst [vmem:[#allocation2 + $0x10] sm:$0xff] %v182
    %207 = vst [vmem:[#allocation2 + $0x18] sm:$0xff] %v185
    %208 = vst [vmem:[#allocation2 + $0x20] sm:$0xff] %v190
    %209 = vst [vmem:[#allocation2 + $0x28] sm:$0xff] %v193
    %210 = vst [vmem:[#allocation2 + $0x30] sm:$0xff] %v198
    %211 = vst [vmem:[#allocation2 + $0x38] sm:$0xff] %v201
    %v212 = vld [vmem:[%s5] sm:$0xf]
    %v213 = vld [vmem:[%s5 + $0x4] sm:$0xf]
    %v214 = vld [vmem:[%s5 + $0x8] sm:$0xf]
    %v215 = vld [vmem:[%s5 + $0xc] sm:$0xf]
    %v216 = vld [vmem:[%s7] sm:$0x1]
    %v218 = vlaneseq
    %v219 = vshrl.u32 %v218, 7
    %v220 = vsub.s32 0, %v219
    %v221 = vrot.slane %v216, %v220
    %v227 = vunpack.c.l.b16 %v212
    %v228 = vunpack.c.l.b16 %v213
    %v229 = vunpack.c.l.b16 %v214
    %v230 = vunpack.c.l.b16 %v215
    %v231 = vpack.c.b16 %v228, %v227
    %v232 = vpack.c.b16 %v230, %v229
    %235 = vmatprep.subr.bf16.mxu0 0
    %236 = vmatpush1.bf16.msra.mxu0 %v231
    %237 = vmatprep.subr.bf16.mxu0 0
    %238 = vmatpush1.bf16.msra.mxu0 %v232
    %239 = vmatprep.subr.bf16.mxu0 0
    %240 = vmatpush1.bf16.msra.mxu0 0
    %241 = vmatprep.subr.bf16.mxu0 0
    %242 = vmatpush1.bf16.msra.mxu0 0
    %243 = vmatprep.subr.bf16.mxu0 0
    %244 = vmatpush1.bf16.msra.mxu0 0
    %245 = vmatprep.subr.bf16.mxu0 0
    %246 = vmatpush1.bf16.msra.mxu0 0
    %247 = vmatprep.subr.bf16.mxu0 0
    %248 = vmatpush1.bf16.msra.mxu0 0
    %249 = vmatprep.subr.bf16.mxu0 0
    %250 = vmatpush1.bf16.msra.mxu0 0
    %251 = vmatprep.subr.bf16.mxu0 0
    %252 = vmatpush1.bf16.msra.mxu0 0
    %253 = vmatprep.subr.bf16.mxu0 0
    %254 = vmatpush1.bf16.msra.mxu0 0
    %255 = vmatprep.subr.bf16.mxu0 0
    %256 = vmatpush1.bf16.msra.mxu0 0
    %257 = vmatprep.subr.bf16.mxu0 0
    %258 = vmatpush1.bf16.msra.mxu0 0
    %259 = vmatprep.subr.bf16.mxu0 0
    %260 = vmatpush1.bf16.msra.mxu0 0
    %261 = vmatprep.subr.bf16.mxu0 0
    %262 = vmatpush1.bf16.msra.mxu0 0
    %263 = vmatprep.subr.bf16.mxu0 0
    %264 = vmatpush1.bf16.msra.mxu0 0
    %265 = vmatprep.subr.bf16.mxu0 0
    %266 = vmatpush1.bf16.msra.mxu0 0
    %267 = vmatprep.mubr.bf16.mxu0 0
    %268 = vmatmul.mubr.bf16.gmra.mrb[0].mxu0 %v128
    %v269 = vpop.f32.mrb[0].mxu0
    %v270 = vadd.f32 %v221, %v269
    %v271 = vpop.f32.mrb[0].mxu0
    %v272 = vpop.f32.mrb[0].mxu0
    %v273 = vadd.f32 %v221, %v272
    %v274 = vpop.f32.mrb[0].mxu0
    %275 = vmatprep.mubr.bf16.mxu0 0
    %276 = vmatmul.mubr.bf16.gmra.mrb[0].mxu0 %v131
    %v277 = vpop.f32.mrb[0].mxu0
    %v278 = vadd.f32 %v221, %v277
    %v279 = vpop.f32.mrb[0].mxu0
    %v280 = vpop.f32.mrb[0].mxu0
    %v281 = vadd.f32 %v221, %v280
    %v282 = vpop.f32.mrb[0].mxu0
    %283 = vmatprep.mubr.bf16.mxu0 0
    %284 = vmatmul.mubr.bf16.gmra.mrb[0].mxu0 %v134
    %v285 = vpop.f32.mrb[0].mxu0
    %v286 = vadd.f32 %v221, %v285
    %v287 = vpop.f32.mrb[0].mxu0
    %v288 = vpop.f32.mrb[0].mxu0
    %v289 = vadd.f32 %v221, %v288
    %v290 = vpop.f32.mrb[0].mxu0
    %291 = vmatprep.mubr.bf16.mxu0 0
    %292 = vmatmul.mubr.bf16.gmra.mrb[0].mxu0 %v137
    %v293 = vpop.f32.mrb[0].mxu0
    %v294 = vadd.f32 %v221, %v293
    %v295 = vpop.f32.mrb[0].mxu0
    %v296 = vpop.f32.mrb[0].mxu0
    %v297 = vadd.f32 %v221, %v296
    %v298 = vpop.f32.mrb[0].mxu0
    %299 = vdwg.mxu0
    %300 = vst [vmem:[#allocation3] sm:$0xff] %v270
    %301 = vst [vmem:[#allocation3 + $0x8] sm:$0xff] %v273
    %302 = vst [vmem:[#allocation3 + $0x10] sm:$0xff] %v278
    %303 = vst [vmem:[#allocation3 + $0x18] sm:$0xff] %v281
    %304 = vst [vmem:[#allocation3 + $0x20] sm:$0xff] %v286
    %305 = vst [vmem:[#allocation3 + $0x28] sm:$0xff] %v289
    %306 = vst [vmem:[#allocation3 + $0x30] sm:$0xff] %v294
    %307 = vst [vmem:[#allocation3 + $0x38] sm:$0xff] %v297
    %v308 = vld [vmem:[%s3] sm:$0xf]
    %v309 = vld [vmem:[%s3 + $0x4] sm:$0xf]
    %v310 = vld [vmem:[%s3 + $0x8] sm:$0xf]
    %v311 = vld [vmem:[%s3 + $0xc] sm:$0xf]
    %v312 = vld [vmem:[%s6] sm:$0xf]
    %v313 = vld [vmem:[%s6 + $0x4] sm:$0xf]
    %v314 = vld [vmem:[%s6 + $0x8] sm:$0xf]
    %v315 = vld [vmem:[%s6 + $0xc] sm:$0xf]
    %v316 = vld [vmem:[%s0] sm:$0xff]
    loop: start=0, step=1, limit=8
    $region58: #{tpu_custom_call.1} parent=1 // loop_pre_header
      _
    $region59: #{tpu_custom_call.1} parent=1 // loop_header
      %s318 = sphi 0, %s322
      %p319 = scmp.ge.s32.totalorder %s318, 8
      %v323 = vphi 0.0, %v484
      %v324 = vphi 0.0, %v485
      %v325 = vphi 0.0, %v516
      %v326 = vphi 0.0, %v517
    $region60: #{tpu_custom_call.1} parent=1 // loop_header_branch
      %321 = sbr.rel (%p319) target = $region64
    $region61: #{tpu_custom_call.1} parent=1 // loop_body
      %s327 = ssub.s32 7, %s318
      %s328 = smul.u32 %s318, 8
      %s329 = scalar_lea.vmem [#allocation2], %s328
      %v330 = vld [vmem:[%s329] sm:$0xff]
      %v331 = vpack.c.bf16 %v323, %v323
      %333 = vrot.lane.b32.xlu0 %v331, 32
      %v334 = vpop.permute.xlu0 %333
      %v339 = vunpack.c.l.b16 %v308
      %v340 = vunpack.c.l.b16 %v309
      %v341 = vunpack.c.l.b16 %v310
      %v342 = vunpack.c.l.b16 %v311
      %v343 = vpack.c.b16 %v340, %v339
      %v344 = vpack.c.b16 %v342, %v341
      %v348 = vsel %vm126, %v334, 0
      %350 = vmatprep.subr.bf16.mxu0 0
      %351 = vmatpush1.bf16.msra.mxu0 %v343
      %352 = vmatprep.subr.bf16.mxu0 0
      %353 = vmatpush1.bf16.msra.mxu0 %v344
      %354 = vmatprep.subr.bf16.mxu0 0
      %355 = vmatpush1.bf16.msra.mxu0 0
      %356 = vmatprep.subr.bf16.mxu0 0
      %357 = vmatpush1.bf16.msra.mxu0 0
      %358 = vmatprep.subr.bf16.mxu0 0
      %359 = vmatpush1.bf16.msra.mxu0 0
      %360 = vmatprep.subr.bf16.mxu0 0
      %361 = vmatpush1.bf16.msra.mxu0 0
      %362 = vmatprep.subr.bf16.mxu0 0
      %363 = vmatpush1.bf16.msra.mxu0 0
      %364 = vmatprep.subr.bf16.mxu0 0
      %365 = vmatpush1.bf16.msra.mxu0 0
      %366 = vmatprep.subr.bf16.mxu0 0
      %367 = vmatpush1.bf16.msra.mxu0 0
      %368 = vmatprep.subr.bf16.mxu0 0
      %369 = vmatpush1.bf16.msra.mxu0 0
      %370 = vmatprep.subr.bf16.mxu0 0
      %371 = vmatpush1.bf16.msra.mxu0 0
      %372 = vmatprep.subr.bf16.mxu0 0
      %373 = vmatpush1.bf16.msra.mxu0 0
      %374 = vmatprep.subr.bf16.mxu0 0
      %375 = vmatpush1.bf16.msra.mxu0 0
      %376 = vmatprep.subr.bf16.mxu0 0
      %377 = vmatpush1.bf16.msra.mxu0 0
      %378 = vmatprep.subr.bf16.mxu0 0
      %379 = vmatpush1.bf16.msra.mxu0 0
      %380 = vmatprep.subr.bf16.mxu0 0
      %381 = vmatpush1.bf16.msra.mxu0 0
      %382 = vmatprep.mubr.bf16.mxu0 0
      %383 = vmatmul.mubr.bf16.gmra.mrb[0].mxu0 %v348
      %v384 = vpop.f32.mrb[0].mxu0
      %v385 = vadd.f32 0.0, %v384
      %v386 = vpop.f32.mrb[0].mxu0
      %v387 = vpop.f32.mrb[0].mxu0
      %v388 = vpop.f32.mrb[0].mxu0
      %389 = vdwg.mxu0
      %v390 = vadd.f32 %v330, %v385
      %s391 = smul.u32 %s327, 8
      %s392 = scalar_lea.vmem [#allocation3], %s391
      %v393 = vld [vmem:[%s392] sm:$0xff]
      %v394 = vpack.c.bf16 %v325, %v325
      %396 = vrot.lane.b32.xlu0 %v394, 32
      %v397 = vpop.permute.xlu0 %396
      %v402 = vunpack.c.l.b16 %v312
      %v403 = vunpack.c.l.b16 %v313
      %v404 = vunpack.c.l.b16 %v314
      %v405 = vunpack.c.l.b16 %v315
      %v406 = vpack.c.b16 %v403, %v402
      %v407 = vpack.c.b16 %v405, %v404
      %v411 = vsel %vm126, %v397, 0
      %413 = vmatprep.subr.bf16.mxu0 0
      %414 = vmatpush1.bf16.msra.mxu0 %v406
      %415 = vmatprep.subr.bf16.mxu0 0
      %416 = vmatpush1.bf16.msra.mxu0 %v407
      %417 = vmatprep.subr.bf16.mxu0 0
      %418 = vmatpush1.bf16.msra.mxu0 0
      %419 = vmatprep.subr.bf16.mxu0 0
      %420 = vmatpush1.bf16.msra.mxu0 0
      %421 = vmatprep.subr.bf16.mxu0 0
      %422 = vmatpush1.bf16.msra.mxu0 0
      %423 = vmatprep.subr.bf16.mxu0 0
      %424 = vmatpush1.bf16.msra.mxu0 0
      %425 = vmatprep.subr.bf16.mxu0 0
      %426 = vmatpush1.bf16.msra.mxu0 0
      %427 = vmatprep.subr.bf16.mxu0 0
      %428 = vmatpush1.bf16.msra.mxu0 0
      %429 = vmatprep.subr.bf16.mxu0 0
      %430 = vmatpush1.bf16.msra.mxu0 0
      %431 = vmatprep.subr.bf16.mxu0 0
      %432 = vmatpush1.bf16.msra.mxu0 0
      %433 = vmatprep.subr.bf16.mxu0 0
      %434 = vmatpush1.bf16.msra.mxu0 0
      %435 = vmatprep.subr.bf16.mxu0 0
      %436 = vmatpush1.bf16.msra.mxu0 0
      %437 = vmatprep.subr.bf16.mxu0 0
      %438 = vmatpush1.bf16.msra.mxu0 0
      %439 = vmatprep.subr.bf16.mxu0 0
      %440 = vmatpush1.bf16.msra.mxu0 0
      %441 = vmatprep.subr.bf16.mxu0 0
      %442 = vmatpush1.bf16.msra.mxu0 0
      %443 = vmatprep.subr.bf16.mxu0 0
      %444 = vmatpush1.bf16.msra.mxu0 0
      %445 = vmatprep.mubr.bf16.mxu0 0
      %446 = vmatmul.mubr.bf16.gmra.mrb[0].mxu0 %v411
      %v447 = vpop.f32.mrb[0].mxu0
      %v448 = vadd.f32 0.0, %v447
      %v449 = vpop.f32.mrb[0].mxu0
      %v450 = vpop.f32.mrb[0].mxu0
      %v451 = vpop.f32.mrb[0].mxu0
      %452 = vdwg.mxu0
      %v453 = vadd.f32 %v393, %v448
      %v454 = vstv %s318
      %vm455 = vcmp.gt.s32.totalorder %v316, %v454
      %v456 = vmul.f32 %v390, 0.5
      %v457 = vtanh.pop %v456
      %v458 = vmul.f32 %v457, 0.5
      %v459 = vadd.f32 %v458, 0.5
      %v460 = vtanh.pop %v390
      %v461 = vmul.f32 %v459, %v324
      %463 = vrot.lane.b32.xlu0 %v460, 64
      %v464 = vpop.permute.xlu0 %463
      %v466 = vmul.f32 %v459, %v464
      %468 = vrot.lane.b32.xlu0 %v466, 32
      %v469 = vpop.permute.xlu0 %468
      %v471 = vadd.f32 %v461, %v469
      %v472 = vtanh.pop %v471
      %474 = vrot.lane.b32.xlu0 %v472, 64
      %v475 = vpop.permute.xlu0 %474
      %v477 = vmul.f32 %v459, %v475
      %v478 = vsel %vm455, 1, 0
      %479 = vset.pattern.permute.xlu0 0
      %480 = vperm.xlu0 %479, %v478
      %v481 = vpop.permute.xlu0 %480
      %vm482 = vcmp.eq.s32.totalorder %v481, 1
      %v483 = vsel %vm482, %v477, 0.0
      %v484 = vsel %vm482, %v477, %v323
      %v485 = vsel %vm482, %v471, %v324
      %v486 = vstv %s327
      %vm487 = vcmp.gt.s32.totalorder %v316, %v486
      %v488 = vmul.f32 %v453, 0.5
      %v489 = vtanh.pop %v488
      %v490 = vmul.f32 %v489, 0.5
      %v491 = vadd.f32 %v490, 0.5
      %v492 = vtanh.pop %v453
      %v493 = vmul.f32 %v491, %v326
      %495 = vrot.lane.b32.xlu0 %v492, 64
      %v496 = vpop.permute.xlu0 %495
      %v498 = vmul.f32 %v491, %v496
      %500 = vrot.lane.b32.xlu0 %v498, 32
      %v501 = vpop.permute.xlu0 %500
      %v503 = vadd.f32 %v493, %v501
      %v504 = vtanh.pop %v503
      %506 = vrot.lane.b32.xlu0 %v504, 64
      %v507 = vpop.permute.xlu0 %506
      %v509 = vmul.f32 %v491, %v507
      %v510 = vsel %vm487, 1, 0
      %511 = vset.pattern.permute.xlu0 0
      %512 = vperm.xlu0 %511, %v510
      %v513 = vpop.permute.xlu0 %512
      %vm514 = vcmp.eq.s32.totalorder %v513, 1
      %v515 = vsel %vm514, %v509, 0.0
      %v516 = vsel %vm514, %v509, %v325
      %v517 = vsel %vm514, %v503, %v326
      %519 = vrot.lane.b32.xlu0 %v483, 32
      %v520 = vpop.permute.xlu0 %519
      %s522 = scalar_lea.vmem [#allocation4], %s328
      %523 = vst.msk [vmem:[%s522] sm:$0xff] %vm126, %v520
      %525 = vrot.lane.b32.xlu0 %v515, 32
      %v526 = vpop.permute.xlu0 %525
      %s528 = scalar_lea.vmem [#allocation5], %s391
      %529 = vst.msk [vmem:[%s528] sm:$0xff] %vm126, %v526
    $region62: #{tpu_custom_call.1} parent=1 // loop_footer
      %s322 = sadd.s32 1, %s318
    $region63: #{tpu_custom_call.1} parent=1 // loop_footer_branch
      %317 = sbr.rel target = $region59
    $region64: #{tpu_custom_call.1} parent=1 // loop_exit
      _
    %v530 = vld [vmem:[#allocation4] sm:$0xff]
    %v531 = vld [vmem:[#allocation4 + $0x8] sm:$0xff]
    %v532 = vld [vmem:[#allocation4 + $0x10] sm:$0xff]
    %v533 = vld [vmem:[#allocation4 + $0x18] sm:$0xff]
    %v534 = vld [vmem:[#allocation4 + $0x20] sm:$0xff]
    %v535 = vld [vmem:[#allocation4 + $0x28] sm:$0xff]
    %v536 = vld [vmem:[#allocation4 + $0x30] sm:$0xff]
    %v537 = vld [vmem:[#allocation4 + $0x38] sm:$0xff]
    %v538 = vld [vmem:[#allocation5] sm:$0xff]
    %v539 = vld [vmem:[#allocation5 + $0x8] sm:$0xff]
    %v540 = vld [vmem:[#allocation5 + $0x10] sm:$0xff]
    %v541 = vld [vmem:[#allocation5 + $0x18] sm:$0xff]
    %v542 = vld [vmem:[#allocation5 + $0x20] sm:$0xff]
    %v543 = vld [vmem:[#allocation5 + $0x28] sm:$0xff]
    %v544 = vld [vmem:[#allocation5 + $0x30] sm:$0xff]
    %v545 = vld [vmem:[#allocation5 + $0x38] sm:$0xff]
    %554 = vrot.lane.b32.xlu0 %v538, 32
    %v555 = vpop.permute.xlu0 %554
    %556 = vrot.lane.b32.xlu0 %v539, 32
    %v557 = vpop.permute.xlu0 %556
    %558 = vrot.lane.b32.xlu0 %v540, 32
    %v559 = vpop.permute.xlu0 %558
    %560 = vrot.lane.b32.xlu0 %v541, 32
    %v561 = vpop.permute.xlu0 %560
    %562 = vrot.lane.b32.xlu0 %v542, 32
    %v563 = vpop.permute.xlu0 %562
    %564 = vrot.lane.b32.xlu0 %v543, 32
    %v565 = vpop.permute.xlu0 %564
    %566 = vrot.lane.b32.xlu0 %v544, 32
    %v567 = vpop.permute.xlu0 %566
    %568 = vrot.lane.b32.xlu0 %v545, 32
    %v569 = vpop.permute.xlu0 %568
    %v578 = vsel %vm126, %v530, %v555
    %v579 = vsel %vm126, %v531, %v557
    %v580 = vsel %vm126, %v532, %v559
    %v581 = vsel %vm126, %v533, %v561
    %v582 = vsel %vm126, %v534, %v563
    %v583 = vsel %vm126, %v535, %v565
    %v584 = vsel %vm126, %v536, %v567
    %v585 = vsel %vm126, %v537, %v569
    %vm586 = vcmask 523264
    %587 = vst.msk [vmem:[#allocation11] sm:$0xff] %vm586, %v578
    %588 = vst.msk [vmem:[#allocation11 + $0x8] sm:$0xff] %vm586, %v579
    %589 = vst.msk [vmem:[#allocation11 + $0x10] sm:$0xff] %vm586, %v580
    %590 = vst.msk [vmem:[#allocation11 + $0x18] sm:$0xff] %vm586, %v581
    %591 = vst.msk [vmem:[#allocation11 + $0x20] sm:$0xff] %vm586, %v582
    %592 = vst.msk [vmem:[#allocation11 + $0x28] sm:$0xff] %vm586, %v583
    %593 = vst.msk [vmem:[#allocation11 + $0x30] sm:$0xff] %vm586, %v584
    %594 = vst.msk [vmem:[#allocation11 + $0x38] sm:$0xff] %vm586, %v585
    %v595 = vpack.c.bf16 %v323, %v323
    %v596 = vld [vmem:[%s8] sm:$0xf]
    %v597 = vld [vmem:[%s8 + $0x4] sm:$0xf]
    %v598 = vld [vmem:[%s8 + $0x8] sm:$0xf]
    %v599 = vld [vmem:[%s8 + $0xc] sm:$0xf]
    %v600 = vpack.c.bf16 %v325, %v325
    %v601 = vld [vmem:[#allocation6] sm:$0xf]
    %v602 = vld [vmem:[#allocation6 + $0x4] sm:$0xf]
    %v603 = vld [vmem:[#allocation6 + $0x8] sm:$0xf]
    %v604 = vld [vmem:[#allocation6 + $0xc] sm:$0xf]
    %606 = vrot.lane.b32.xlu0 %v600, 32
    %v607 = vpop.permute.xlu0 %606
    %v612 = vunpack.c.l.b16 %v601
    %v613 = vunpack.c.l.b16 %v602
    %v614 = vunpack.c.l.b16 %v603
    %v615 = vunpack.c.l.b16 %v604
    %v616 = vpack.c.b16 %v613, %v612
    %v617 = vpack.c.b16 %v615, %v614
    %v621 = vsel %vm126, %v607, 0
    %623 = vmatprep.subr.bf16.mxu0 0
    %624 = vmatpush1.bf16.msra.mxu0 %v616
    %625 = vmatprep.subr.bf16.mxu0 0
    %626 = vmatpush1.bf16.msra.mxu0 %v617
    %627 = vmatprep.subr.bf16.mxu0 0
    %628 = vmatpush1.bf16.msra.mxu0 0
    %629 = vmatprep.subr.bf16.mxu0 0
    %630 = vmatpush1.bf16.msra.mxu0 0
    %631 = vmatprep.subr.bf16.mxu0 0
    %632 = vmatpush1.bf16.msra.mxu0 0
    %633 = vmatprep.subr.bf16.mxu0 0
    %634 = vmatpush1.bf16.msra.mxu0 0
    %635 = vmatprep.subr.bf16.mxu0 0
    %636 = vmatpush1.bf16.msra.mxu0 0
    %637 = vmatprep.subr.bf16.mxu0 0
    %638 = vmatpush1.bf16.msra.mxu0 0
    %639 = vmatprep.subr.bf16.mxu0 0
    %640 = vmatpush1.bf16.msra.mxu0 0
    %641 = vmatprep.subr.bf16.mxu0 0
    %642 = vmatpush1.bf16.msra.mxu0 0
    %643 = vmatprep.subr.bf16.mxu0 0
    %644 = vmatpush1.bf16.msra.mxu0 0
    %645 = vmatprep.subr.bf16.mxu0 0
    %646 = vmatpush1.bf16.msra.mxu0 0
    %647 = vmatprep.subr.bf16.mxu0 0
    %648 = vmatpush1.bf16.msra.mxu0 0
    %649 = vmatprep.subr.bf16.mxu0 0
    %650 = vmatpush1.bf16.msra.mxu0 0
    %651 = vmatprep.subr.bf16.mxu0 0
    %652 = vmatpush1.bf16.msra.mxu0 0
    %653 = vmatprep.subr.bf16.mxu0 0
    %654 = vmatpush1.bf16.msra.mxu0 0
    %655 = vmatprep.mubr.bf16.mxu0 0
    %656 = vmatmul.mubr.bf16.gmra.mrb[0].mxu0 %v621
    %v657 = vpop.f32.mrb[0].mxu0
    %v658 = vadd.f32 0.0, %v657
    %v659 = vpop.f32.mrb[0].mxu0
    %v660 = vpop.f32.mrb[0].mxu0
    %v661 = vpop.f32.mrb[0].mxu0
    %662 = vdwg.mxu0
    %664 = vrot.lane.b32.xlu0 %v595, 32
    %v665 = vpop.permute.xlu0 %664
    %v670 = vunpack.c.l.b16 %v596
    %v671 = vunpack.c.l.b16 %v597
    %v672 = vunpack.c.l.b16 %v598
    %v673 = vunpack.c.l.b16 %v599
    %v674 = vpack.c.b16 %v671, %v670
    %v675 = vpack.c.b16 %v673, %v672
    %v679 = vsel %vm126, %v665, 0
    %681 = vmatprep.subr.bf16.mxu0 0
    %682 = vmatpush1.bf16.msra.mxu0 %v674
    %683 = vmatprep.subr.bf16.mxu0 0
    %684 = vmatpush1.bf16.msra.mxu0 %v675
    %685 = vmatprep.subr.bf16.mxu0 0
    %686 = vmatpush1.bf16.msra.mxu0 0
    %687 = vmatprep.subr.bf16.mxu0 0
    %688 = vmatpush1.bf16.msra.mxu0 0
    %689 = vmatprep.subr.bf16.mxu0 0
    %690 = vmatpush1.bf16.msra.mxu0 0
    %691 = vmatprep.subr.bf16.mxu0 0
    %692 = vmatpush1.bf16.msra.mxu0 0
    %693 = vmatprep.subr.bf16.mxu0 0
    %694 = vmatpush1.bf16.msra.mxu0 0
    %695 = vmatprep.subr.bf16.mxu0 0
    %696 = vmatpush1.bf16.msra.mxu0 0
    %697 = vmatprep.subr.bf16.mxu0 0
    %698 = vmatpush1.bf16.msra.mxu0 0
    %699 = vmatprep.subr.bf16.mxu0 0
    %700 = vmatpush1.bf16.msra.mxu0 0
    %701 = vmatprep.subr.bf16.mxu0 0
    %702 = vmatpush1.bf16.msra.mxu0 0
    %703 = vmatprep.subr.bf16.mxu0 0
    %704 = vmatpush1.bf16.msra.mxu0 0
    %705 = vmatprep.subr.bf16.mxu0 0
    %706 = vmatpush1.bf16.msra.mxu0 0
    %707 = vmatprep.subr.bf16.mxu0 0
    %708 = vmatpush1.bf16.msra.mxu0 0
    %709 = vmatprep.subr.bf16.mxu0 0
    %710 = vmatpush1.bf16.msra.mxu0 0
    %711 = vmatprep.subr.bf16.mxu0 0
    %712 = vmatpush1.bf16.msra.mxu0 0
    %713 = vmatprep.mubr.bf16.mxu0 0
    %714 = vmatmul.mubr.bf16.gmra.mrb[0].mxu0 %v679
    %v715 = vpop.f32.mrb[0].mxu0
    %v716 = vadd.f32 %v658, %v715
    %v717 = vpop.f32.mrb[0].mxu0
    %v718 = vpop.f32.mrb[0].mxu0
    %v719 = vpop.f32.mrb[0].mxu0
    %720 = vdwg.mxu0
    %721 = vst.msk [vmem:[#allocation12] sm:$0xff] %vm126, %v716
    %v722 = vpack.c.bf16 %v324, %v324
    %v723 = vld [vmem:[#allocation9] sm:$0xf]
    %v724 = vld [vmem:[#allocation9 + $0x4] sm:$0xf]
    %v725 = vld [vmem:[#allocation9 + $0x8] sm:$0xf]
    %v726 = vld [vmem:[#allocation9 + $0xc] sm:$0xf]
    %v727 = vpack.c.bf16 %v326, %v326
    %v728 = vld [vmem:[%s11] sm:$0xf]
    %v729 = vld [vmem:[%s11 + $0x4] sm:$0xf]
    %v730 = vld [vmem:[%s11 + $0x8] sm:$0xf]
    %v731 = vld [vmem:[%s11 + $0xc] sm:$0xf]
    %733 = vrot.lane.b32.xlu0 %v727, 96
    %v734 = vpop.permute.xlu0 %733
    %v739 = vunpack.c.l.b16 %v728
    %v740 = vunpack.c.l.b16 %v729
    %v741 = vunpack.c.l.b16 %v730
    %v742 = vunpack.c.l.b16 %v731
    %v743 = vpack.c.b16 %v740, %v739
    %v744 = vpack.c.b16 %v742, %v741
    %v748 = vsel %vm126, %v734, 0
    %750 = vmatprep.subr.bf16.mxu0 0
    %751 = vmatpush1.bf16.msra.mxu0 %v743
    %752 = vmatprep.subr.bf16.mxu0 0
    %753 = vmatpush1.bf16.msra.mxu0 %v744
    %754 = vmatprep.subr.bf16.mxu0 0
    %755 = vmatpush1.bf16.msra.mxu0 0
    %756 = vmatprep.subr.bf16.mxu0 0
    %757 = vmatpush1.bf16.msra.mxu0 0
    %758 = vmatprep.subr.bf16.mxu0 0
    %759 = vmatpush1.bf16.msra.mxu0 0
    %760 = vmatprep.subr.bf16.mxu0 0
    %761 = vmatpush1.bf16.msra.mxu0 0
    %762 = vmatprep.subr.bf16.mxu0 0
    %763 = vmatpush1.bf16.msra.mxu0 0
    %764 = vmatprep.subr.bf16.mxu0 0
    %765 = vmatpush1.bf16.msra.mxu0 0
    %766 = vmatprep.subr.bf16.mxu0 0
    %767 = vmatpush1.bf16.msra.mxu0 0
    %768 = vmatprep.subr.bf16.mxu0 0
    %769 = vmatpush1.bf16.msra.mxu0 0
    %770 = vmatprep.subr.bf16.mxu0 0
    %771 = vmatpush1.bf16.msra.mxu0 0
    %772 = vmatprep.subr.bf16.mxu0 0
    %773 = vmatpush1.bf16.msra.mxu0 0
    %774 = vmatprep.subr.bf16.mxu0 0
    %775 = vmatpush1.bf16.msra.mxu0 0
    %776 = vmatprep.subr.bf16.mxu0 0
    %777 = vmatpush1.bf16.msra.mxu0 0
    %778 = vmatprep.subr.bf16.mxu0 0
    %779 = vmatpush1.bf16.msra.mxu0 0
    %780 = vmatprep.subr.bf16.mxu0 0
    %781 = vmatpush1.bf16.msra.mxu0 0
    %782 = vmatprep.mubr.bf16.mxu0 0
    %783 = vmatmul.mubr.bf16.gmra.mrb[0].mxu0 %v748
    %v784 = vpop.f32.mrb[0].mxu0
    %v785 = vadd.f32 0.0, %v784
    %v786 = vpop.f32.mrb[0].mxu0
    %v787 = vpop.f32.mrb[0].mxu0
    %v788 = vpop.f32.mrb[0].mxu0
    %789 = vdwg.mxu0
    %791 = vrot.lane.b32.xlu0 %v722, 96
    %v792 = vpop.permute.xlu0 %791
    %v797 = vunpack.c.l.b16 %v723
    %v798 = vunpack.c.l.b16 %v724
    %v799 = vunpack.c.l.b16 %v725
    %v800 = vunpack.c.l.b16 %v726
    %v801 = vpack.c.b16 %v798, %v797
    %v802 = vpack.c.b16 %v800, %v799
    %v806 = vsel %vm126, %v792, 0
    %808 = vmatprep.subr.bf16.mxu0 0
    %809 = vmatpush1.bf16.msra.mxu0 %v801
    %810 = vmatprep.subr.bf16.mxu0 0
    %811 = vmatpush1.bf16.msra.mxu0 %v802
    %812 = vmatprep.subr.bf16.mxu0 0
    %813 = vmatpush1.bf16.msra.mxu0 0
    %814 = vmatprep.subr.bf16.mxu0 0
    %815 = vmatpush1.bf16.msra.mxu0 0
    %816 = vmatprep.subr.bf16.mxu0 0
    %817 = vmatpush1.bf16.msra.mxu0 0
    %818 = vmatprep.subr.bf16.mxu0 0
    %819 = vmatpush1.bf16.msra.mxu0 0
    %820 = vmatprep.subr.bf16.mxu0 0
    %821 = vmatpush1.bf16.msra.mxu0 0
    %822 = vmatprep.subr.bf16.mxu0 0
    %823 = vmatpush1.bf16.msra.mxu0 0
    %824 = vmatprep.subr.bf16.mxu0 0
    %825 = vmatpush1.bf16.msra.mxu0 0
    %826 = vmatprep.subr.bf16.mxu0 0
    %827 = vmatpush1.bf16.msra.mxu0 0
    %828 = vmatprep.subr.bf16.mxu0 0
    %829 = vmatpush1.bf16.msra.mxu0 0
    %830 = vmatprep.subr.bf16.mxu0 0
    %831 = vmatpush1.bf16.msra.mxu0 0
    %832 = vmatprep.subr.bf16.mxu0 0
    %833 = vmatpush1.bf16.msra.mxu0 0
    %834 = vmatprep.subr.bf16.mxu0 0
    %835 = vmatpush1.bf16.msra.mxu0 0
    %836 = vmatprep.subr.bf16.mxu0 0
    %837 = vmatpush1.bf16.msra.mxu0 0
    %838 = vmatprep.subr.bf16.mxu0 0
    %839 = vmatpush1.bf16.msra.mxu0 0
    %840 = vmatprep.mubr.bf16.mxu0 0
    %841 = vmatmul.mubr.bf16.gmra.mrb[0].mxu0 %v806
    %v842 = vpop.f32.mrb[0].mxu0
    %v843 = vadd.f32 %v785, %v842
    %v844 = vpop.f32.mrb[0].mxu0
    %v845 = vpop.f32.mrb[0].mxu0
    %v846 = vpop.f32.mrb[0].mxu0
    %847 = vdwg.mxu0
    %848 = vst.msk [vmem:[#allocation14] sm:$0xff] %vm126, %v843
    // Predicated region
    $region65: #{tpu_custom_call.1} parent=1 // pred_check
      _
    $region66: #{tpu_custom_call.1} parent=1 // pred_check_branch
      %850 = sbr.rel (0) target = $region68
    $region67: #{tpu_custom_call.1} parent=1 // pred_region
      %s852 = ssub.s32 1024, 1024
      %853 = vsyncadd [#allocation8], %s852
      %s854 = sshll.u32 [#allocation11], 4
      %s855 = int_to_ptr.vmem [resolvable:$true] %s854
      %860 = dma.vmem_to_hbm [thread:$0]  %s855, 1024, %s12, [#allocation8], 128, 128, 8
    $region68: #{tpu_custom_call.1} parent=1 // pred_fallthru
      _
    // Predicated region
    $region69: #{tpu_custom_call.1} parent=1 // pred_check
      _
    $region70: #{tpu_custom_call.1} parent=1 // pred_check_branch
      %862 = sbr.rel (0) target = $region72
    $region71: #{tpu_custom_call.1} parent=1 // pred_region
      %s864 = ssub.s32 128, 128
      %865 = vsyncadd [#allocation13], %s864
      %s867 = sshll.u32 [#allocation12], 4
      %s868 = int_to_ptr.vmem [resolvable:$true] %s867
      %870 = dma.vmem_to_hbm [thread:$0]  %s868, 128, %s13, [#allocation13]
    $region72: #{tpu_custom_call.1} parent=1 // pred_fallthru
      _
    // Predicated region
    $region73: #{tpu_custom_call.1} parent=1 // pred_check
      _
    $region74: #{tpu_custom_call.1} parent=1 // pred_check_branch
      %872 = sbr.rel (0) target = $region76
    $region75: #{tpu_custom_call.1} parent=1 // pred_region
      %s874 = ssub.s32 128, 128
      %875 = vsyncadd [#allocation13], %s874
      %s877 = sshll.u32 [#allocation14], 4
      %s878 = int_to_ptr.vmem [resolvable:$true] %s877
      %880 = dma.vmem_to_hbm [thread:$0]  %s878, 128, %s14, [#allocation13]
    $region76: #{tpu_custom_call.1} parent=1 // pred_fallthru
      _
    // Predicated region
    $region77: #{tpu_custom_call.1} parent=1 // pred_check
      _
    $region78: #{tpu_custom_call.1} parent=1 // pred_check_branch
      %882 = sbr.rel (0) target = $region80
    $region79: #{tpu_custom_call.1} parent=1 // pred_region
      %883 = dma.done [#allocation8], 1024
    $region80: #{tpu_custom_call.1} parent=1 // pred_fallthru
      _
    // Predicated region
    $region81: #{tpu_custom_call.1} parent=1 // pred_check
      _
    $region82: #{tpu_custom_call.1} parent=1 // pred_check_branch
      %885 = sbr.rel (0) target = $region84
    $region83: #{tpu_custom_call.1} parent=1 // pred_region
      %886 = dma.done [#allocation13], 128
    $region84: #{tpu_custom_call.1} parent=1 // pred_fallthru
      _
    // Predicated region
    $region85: #{tpu_custom_call.1} parent=1 // pred_check
      _
    $region86: #{tpu_custom_call.1} parent=1 // pred_check_branch
      %888 = sbr.rel (0) target = $region88
    $region87: #{tpu_custom_call.1} parent=1 // pred_region
      %889 = dma.done [#allocation13], 128
    $region88: #{tpu_custom_call.1} parent=1 // pred_fallthru
      _
    %890 = vsyncpa [#allocation7], 1
    %891 = vsyncpa [#allocation10], 1
    %892 = vsyncpa [#allocation8], 1
    %893 = vsyncpa [#allocation13], 1

</llo_original>
